<compile_context>
chip_gen: v5e
topology: v5e:2x2
jax: 0.10.0
libtpu: 0.0.40
codegen_flags: <defaults>
</compile_context>

<pallas_src>
import functools

import jax
import jax.numpy as jnp
from jax.experimental import pallas as pl
from jax.experimental.pallas import tpu as pltpu

_BN_EPS = 1e-5


# ----------------------------------------------------------------------------
# Pallas kernel: TFatten forward for one batch tile, fully lane-dense.
# ----------------------------------------------------------------------------
def tfatten_kernel(x_ref, m_ref, ef_ref, et_ref, sh_ref, sw_ref, w_ref, p_ref,
                   o_ref, *, h):
    # x_ref:  (R, HW)       lane-dense input rows, R = block_batch * C
    # m_ref:  (HW, H+W)     reduction matrix: cols [0:H]->mean over W,
    #                       cols [H:H+W]->mean over H
    # ef_ref: (H, HW)       one-hot expansion: f[r, j//W]
    # et_ref: (W, HW)       one-hot expansion: t[r, j%W]
    # sh_ref: (2, H, H)     shift matrices (eye(k=+1), eye(k=-1)) for length H
    # sw_ref: (2, W, W)     shift matrices for length W
    # w_ref:  (4, 3R, R)    [t1, t2, f1, f2] conv weights, taps stacked along
    #                       rows, block-diagonal over the batch tile
    # p_ref:  (R, 6)        [b_t1, b_t2, b_f1, b_f2, bn_scale, bn_shift]
    # o_ref:  (R, HW)
    r = x_ref.shape[0]
    xf = x_ref[...].astype(jnp.float32)                        # (R, HW)

    # Both spatial means in one MXU pass over x: (R, HW) @ (HW, H+W).
    a = jnp.dot(xf, m_ref[...], preferred_element_type=jnp.float32)
    a_f = a[:, :h]          # (R, H)  == torch.mean(x, dim=-1)
    a_t = a[:, h:]          # (R, W)  == torch.mean(x, dim=-2)

    p = p_ref[...]                                             # (R, 6)

    def conv1d(v, w3, s_ref, bias):
        # v: (R, L); w3: (3R, R) stacked [tap0; tap1; tap2] block-diag weights;
        # s_ref: (2, L, L) shift matrices; bias: (R, 1).
        # out[:, l] = W0 @ v[:, l-1] + W1 @ v[:, l] + W2 @ v[:, l+1] + bias,
        # with zero padding handled implicitly by the shift matrices.
        y = jnp.dot(w3, v, preferred_element_type=jnp.float32)  # (3R, L)
        return (jnp.dot(y[0:r], s_ref[0], preferred_element_type=jnp.float32)
                + y[r:2 * r]
                + jnp.dot(y[2 * r:], s_ref[1],
                          preferred_element_type=jnp.float32)
                + bias)

    # t branch: Conv1d+ReLU, Conv1d+Sigmoid on length-W sequences.
    t = jnp.maximum(conv1d(a_t, w_ref[0], sw_ref, p[:, 0:1]), 0.0)
    t = jax.nn.sigmoid(conv1d(t, w_ref[1], sw_ref, p[:, 1:2]))  # (R, W)
    # f branch: Conv1d+ReLU, Conv1d+Sigmoid on length-H sequences.
    f = jnp.maximum(conv1d(a_f, w_ref[2], sh_ref, p[:, 2:3]), 0.0)
    f = jax.nn.sigmoid(conv1d(f, w_ref[3], sh_ref, p[:, 3:4]))  # (R, H)

    # Expand gates straight into the lane-dense layout on the MXU and fuse the
    # BatchNorm affine + final multiply into one streaming expression.
    gate = (jnp.dot(f, ef_ref[...], preferred_element_type=jnp.float32)
            * jnp.dot(t, et_ref[...], preferred_element_type=jnp.float32))
    o_ref[...] = (gate * (xf * p[:, 4:5] + p[:, 5:6])).astype(o_ref.dtype)


# ----------------------------------------------------------------------------
# Wrapper: parameter packing (layout plumbing) + pallas_call.
# ----------------------------------------------------------------------------
def _pick_block_batch(B, C):
    # Prefer >=2 grid steps (v7x has 2 TensorCores) while keeping the block's
    # sublane dim (bt*C) a multiple of 8; otherwise fall back to the full
    # batch, where block == full array dims is always a legal BlockSpec.
    for bt in range(B // 2, 0, -1):
        if B % bt == 0 and (bt * C) % 8 == 0:
            return bt
    return B


@functools.partial(jax.jit, static_argnames=("block_batch",))
def tfatten_forward(x, params, block_batch=None):
    B, C, H, W = x.shape
    HW = H * W
    bt = block_batch if block_batch is not None else _pick_block_batch(B, C)
    assert B % bt == 0
    R = bt * C
    f32 = jnp.float32

    # ---- parameter packing (wrapper-side, one-time layout plumbing) ----
    eye_bt = jnp.eye(bt, dtype=f32)

    def pack_conv(w):  # PyTorch Conv1d weight (C_out, C_in, 3) -> (3R, R)
        w = w.astype(f32)
        return jnp.concatenate(
            [jnp.kron(eye_bt, w[:, :, k]) for k in range(3)], axis=0)

    w_stk = jnp.stack(
        [pack_conv(params[k][0]) for k in ("t1", "t2", "f1", "f2")])  # (4,3R,R)

    gamma, beta, mean, var = params["bn"]
    inv = gamma.astype(f32) / jnp.sqrt(var.astype(f32) + _BN_EPS)
    shift = beta.astype(f32) - mean.astype(f32) * inv

    def rep(v):  # (C,) -> (R, 1), repeated over the batch tile
        return jnp.tile(v.astype(f32), (bt,))[:, None]

    p_pack = jnp.concatenate(
        [rep(params["t1"][1]), rep(params["t2"][1]),
         rep(params["f1"][1]), rep(params["f2"][1]),
         rep(inv), rep(shift)], axis=1)                               # (R, 6)

    # Constant projection / shift matrices (resident in VMEM across steps).
    j = jnp.arange(HW)
    e_f = (j[None, :] // W == jnp.arange(H)[:, None]).astype(f32)     # (H, HW)
    e_t = (j[None, :] % W == jnp.arange(W)[:, None]).astype(f32)      # (W, HW)
    m_red = jnp.concatenate([e_f.T / W, e_t.T / H], axis=1)           # (HW,H+W)
    s_h = jnp.stack([jnp.eye(H, k=1, dtype=f32), jnp.eye(H, k=-1, dtype=f32)])
    s_w = jnp.stack([jnp.eye(W, k=1, dtype=f32), jnp.eye(W, k=-1, dtype=f32)])

    # ---- lane-dense 2-D view of x and the pallas_call ----
    x2d = x.reshape(B * C, HW)

    out2d = pl.pallas_call(
        functools.partial(tfatten_kernel, h=H),
        out_shape=jax.ShapeDtypeStruct((B * C, HW), x.dtype),
        grid=(B // bt,),
        in_specs=[
            pl.BlockSpec((R, HW), lambda b: (b, 0)),
            pl.BlockSpec((HW, H + W), lambda b: (0, 0)),
            pl.BlockSpec((H, HW), lambda b: (0, 0)),
            pl.BlockSpec((W, HW), lambda b: (0, 0)),
            pl.BlockSpec((2, H, H), lambda b: (0, 0, 0)),
            pl.BlockSpec((2, W, W), lambda b: (0, 0, 0)),
            pl.BlockSpec((4, 3 * R, R), lambda b: (0, 0, 0)),
            pl.BlockSpec((R, 6), lambda b: (0, 0)),
        ],
        out_specs=pl.BlockSpec((R, HW), lambda b: (b, 0)),
        compiler_params=pltpu.CompilerParams(
            dimension_semantics=("parallel",),
            vmem_limit_bytes=64 * 1024 * 1024),
    )(x2d, m_red, e_f, e_t, s_h, s_w, w_stk, p_pack)
    return out2d.reshape(B, C, H, W)


# ----------------------------------------------------------------------------
# Pure-JAX reference (for correctness check)
# ----------------------------------------------------------------------------
def _conv1d_ref(a, w, b):
    # a: (B, C, L); w: (C_out, C_in, 3) (PyTorch layout); b: (C_out,)
    out = jax.lax.conv_general_dilated(
        a, w, window_strides=(1,), padding=((1, 1),),
        dimension_numbers=("NCH", "OIH", "NCH"))
    return out + b[None, :, None]


def tfatten_ref(x, params):
    gamma, beta, rmean, rvar = params["bn"]
    x_hat = ((x - rmean[None, :, None, None])
             / jnp.sqrt(rvar[None, :, None, None] + _BN_EPS)
             * gamma[None, :, None, None] + beta[None, :, None, None])
    a_t = jnp.mean(x, axis=-2)        # (B, C, W)
    a_f = jnp.mean(x, axis=-1)        # (B, C, H)
    a_t = jax.nn.relu(_conv1d_ref(a_t, *params["t1"]))
    a_t = jax.nn.sigmoid(_conv1d_ref(a_t, *params["t2"]))
    a_f = jax.nn.relu(_conv1d_ref(a_f, *params["f1"]))
    a_f = jax.nn.sigmoid(_conv1d_ref(a_f, *params["f2"]))
    a_t = a_t[:, :, None, :]          # (B, C, 1, W)
    a_f = a_f[:, :, :, None]          # (B, C, H, 1)
    return a_t * a_f * x_hat


# ----------------------------------------------------------------------------
# Main
# ----------------------------------------------------------------------------
if __name__ == "__main__":
    B, C, H, W = 4, 4, 16, 16          # in_planes = 4
    key = jax.random.PRNGKey(0)
    ks = jax.random.split(key, 16)

    x = jax.random.normal(ks[0], (B, C, H, W), jnp.float32)

    def conv_params(kw, kb):
        w = jax.random.normal(kw, (C, C, 3), jnp.float32) * 0.3
        b = jax.random.normal(kb, (C,), jnp.float32) * 0.1
        return w, b

    params = {
        "t1": conv_params(ks[1], ks[2]),
        "t2": conv_params(ks[3], ks[4]),
        "f1": conv_params(ks[5], ks[6]),
        "f2": conv_params(ks[7], ks[8]),
        "bn": (1.0 + 0.1 * jax.random.normal(ks[9], (C,), jnp.float32),
               0.1 * jax.random.normal(ks[10], (C,), jnp.float32),
               0.1 * jax.random.normal(ks[11], (C,), jnp.float32),
               jnp.abs(jax.random.normal(ks[12], (C,), jnp.float32)) + 0.5),
    }

    ref = jax.block_until_ready(tfatten_ref(x, params))

    # Default tiling: block_batch=2 -> grid of 2 parallel steps.
    out = jax.block_until_ready(tfatten_forward(x, params))
    assert out.shape == (B, C, H, W)
    err = float(jnp.max(jnp.abs(out - ref)))
    assert jnp.allclose(out, ref, rtol=1e-4, atol=1e-4), f"max abs err = {err}"

    # Fallback tiling: whole batch in one block (single grid step).
    out_full = jax.block_until_ready(tfatten_forward(x, params, block_batch=B))
    err_full = float(jnp.max(jnp.abs(out_full - ref)))
    assert jnp.allclose(out_full, ref, rtol=1e-4, atol=1e-4), (
        f"max abs err (full batch block) = {err_full}")

    print("KERNEL_OK")
</pallas_src>

<mosaic_0001>
module attributes {stable_mosaic.version = 11 : i64} {
  func.func @tfatten_kernel(%arg0: i32, %arg1: memref<8x256xf32, #tpu.memory_space<vmem>>, %arg2: memref<256x32xf32, #tpu.memory_space<vmem>>, %arg3: memref<16x256xf32, #tpu.memory_space<vmem>>, %arg4: memref<16x256xf32, #tpu.memory_space<vmem>>, %arg5: memref<2x16x16xf32, #tpu.memory_space<vmem>>, %arg6: memref<2x16x16xf32, #tpu.memory_space<vmem>>, %arg7: memref<4x24x8xf32, #tpu.memory_space<vmem>>, %arg8: memref<8x6xf32, #tpu.memory_space<vmem>>, %arg9: memref<8x256xf32, #tpu.memory_space<vmem>>) attributes {dimension_semantics = [#tpu.dimension_semantics<parallel>], iteration_bounds = array<i64: 2>, scalar_prefetch = 0 : i64, scratch_operands = 0 : i64, tpu.core_type = #tpu.core_type<tc>, window_params = [{transform_indices = @transform_0, window_bounds = array<i64: 8, 256>}, {pipeline_mode = #tpu.pipeline_mode<synchronous>, transform_indices = @transform_1, window_bounds = array<i64: 256, 32>}, {pipeline_mode = #tpu.pipeline_mode<synchronous>, transform_indices = @transform_2, window_bounds = array<i64: 16, 256>}, {pipeline_mode = #tpu.pipeline_mode<synchronous>, transform_indices = @transform_3, window_bounds = array<i64: 16, 256>}, {pipeline_mode = #tpu.pipeline_mode<synchronous>, transform_indices = @transform_4, window_bounds = array<i64: 2, 16, 16>}, {pipeline_mode = #tpu.pipeline_mode<synchronous>, transform_indices = @transform_5, window_bounds = array<i64: 2, 16, 16>}, {pipeline_mode = #tpu.pipeline_mode<synchronous>, transform_indices = @transform_6, window_bounds = array<i64: 4, 24, 8>}, {pipeline_mode = #tpu.pipeline_mode<synchronous>, transform_indices = @transform_7, window_bounds = array<i64: 8, 6>}, {transform_indices = @transform_8, window_bounds = array<i64: 8, 256>}]} {
    %c0 = arith.constant 0 : index
    %c0_0 = arith.constant 0 : index
    %0 = vector.load %arg1[%c0, %c0_0] : memref<8x256xf32, #tpu.memory_space<vmem>>, vector<8x256xf32>
    %c0_1 = arith.constant 0 : index
    %c0_2 = arith.constant 0 : index
    %1 = vector.load %arg2[%c0_1, %c0_2] : memref<256x32xf32, #tpu.memory_space<vmem>>, vector<256x32xf32>
    %cst = arith.constant dense<0.000000e+00> : vector<8x32xf32>
    %2 = tpu.matmul %0, %1, %cst {dimension_numbers = #tpu.dot_dimension_numbers<[1], [0], [0], [1], [0, 0, 1, 1], [], []>} : vector<8x256xf32>, vector<256x32xf32>, vector<8x32xf32> -> vector<8x32xf32>
    %3 = vector.extract_strided_slice %2 {offsets = [0, 0], sizes = [8, 16], strides = [1, 1]} : vector<8x32xf32> to vector<8x16xf32>
    %4 = vector.extract_strided_slice %2 {offsets = [0, 16], sizes = [8, 16], strides = [1, 1]} : vector<8x32xf32> to vector<8x16xf32>
    %c0_3 = arith.constant 0 : index
    %c0_4 = arith.constant 0 : index
    %5 = vector.load %arg8[%c0_3, %c0_4] : memref<8x6xf32, #tpu.memory_space<vmem>>, vector<8x6xf32>
    %c0_5 = arith.constant 0 : index
    %c0_6 = arith.constant 0 : index
    %c0_7 = arith.constant 0 : index
    %6 = vector.load %arg7[%c0_5, %c0_6, %c0_7] : memref<4x24x8xf32, #tpu.memory_space<vmem>>, vector<1x24x8xf32>
    %7 = vector.shape_cast %6 : vector<1x24x8xf32> to vector<24x8xf32>
    %8 = vector.extract_strided_slice %5 {offsets = [0, 0], sizes = [8, 1], strides = [1, 1]} : vector<8x6xf32> to vector<8x1xf32>
    %cst_8 = arith.constant dense<0.000000e+00> : vector<24x16xf32>
    %9 = tpu.matmul %7, %4, %cst_8 {dimension_numbers = #tpu.dot_dimension_numbers<[1], [0], [0], [1], [0, 0, 1, 1], [], []>} : vector<24x8xf32>, vector<8x16xf32>, vector<24x16xf32> -> vector<24x16xf32>
    %10 = vector.extract_strided_slice %9 {offsets = [0, 0], sizes = [8, 16], strides = [1, 1]} : vector<24x16xf32> to vector<8x16xf32>
    %c0_9 = arith.constant 0 : index
    %c0_10 = arith.constant 0 : index
    %c0_11 = arith.constant 0 : index
    %11 = vector.load %arg6[%c0_9, %c0_10, %c0_11] : memref<2x16x16xf32, #tpu.memory_space<vmem>>, vector<1x16x16xf32>
    %12 = vector.shape_cast %11 : vector<1x16x16xf32> to vector<16x16xf32>
    %cst_12 = arith.constant dense<0.000000e+00> : vector<8x16xf32>
    %13 = tpu.matmul %10, %12, %cst_12 {dimension_numbers = #tpu.dot_dimension_numbers<[1], [0], [0], [1], [0, 0, 1, 1], [], []>} : vector<8x16xf32>, vector<16x16xf32>, vector<8x16xf32> -> vector<8x16xf32>
    %14 = vector.extract_strided_slice %9 {offsets = [8, 0], sizes = [8, 16], strides = [1, 1]} : vector<24x16xf32> to vector<8x16xf32>
    %15 = arith.addf %13, %14 : vector<8x16xf32>
    %16 = vector.extract_strided_slice %9 {offsets = [16, 0], sizes = [8, 16], strides = [1, 1]} : vector<24x16xf32> to vector<8x16xf32>
    %c1 = arith.constant 1 : index
    %c0_13 = arith.constant 0 : index
    %c0_14 = arith.constant 0 : index
    %17 = vector.load %arg6[%c1, %c0_13, %c0_14] : memref<2x16x16xf32, #tpu.memory_space<vmem>>, vector<1x16x16xf32>
    %18 = vector.shape_cast %17 : vector<1x16x16xf32> to vector<16x16xf32>
    %cst_15 = arith.constant dense<0.000000e+00> : vector<8x16xf32>
    %19 = tpu.matmul %16, %18, %cst_15 {dimension_numbers = #tpu.dot_dimension_numbers<[1], [0], [0], [1], [0, 0, 1, 1], [], []>} : vector<8x16xf32>, vector<16x16xf32>, vector<8x16xf32> -> vector<8x16xf32>
    %20 = arith.addf %15, %19 : vector<8x16xf32>
    %21 = vector.broadcast %8 : vector<8x1xf32> to vector<8x16xf32>
    %22 = arith.addf %20, %21 : vector<8x16xf32>
    %cst_16 = arith.constant 0.000000e+00 : f32
    %23 = vector.broadcast %cst_16 : f32 to vector<8x16xf32>
    %24 = arith.maximumf %22, %23 : vector<8x16xf32>
    %c1_17 = arith.constant 1 : index
    %c0_18 = arith.constant 0 : index
    %c0_19 = arith.constant 0 : index
    %25 = vector.load %arg7[%c1_17, %c0_18, %c0_19] : memref<4x24x8xf32, #tpu.memory_space<vmem>>, vector<1x24x8xf32>
    %26 = vector.shape_cast %25 : vector<1x24x8xf32> to vector<24x8xf32>
    %27 = vector.extract_strided_slice %5 {offsets = [0, 1], sizes = [8, 1], strides = [1, 1]} : vector<8x6xf32> to vector<8x1xf32>
    %cst_20 = arith.constant dense<0.000000e+00> : vector<24x16xf32>
    %28 = tpu.matmul %26, %24, %cst_20 {dimension_numbers = #tpu.dot_dimension_numbers<[1], [0], [0], [1], [0, 0, 1, 1], [], []>} : vector<24x8xf32>, vector<8x16xf32>, vector<24x16xf32> -> vector<24x16xf32>
    %29 = vector.extract_strided_slice %28 {offsets = [0, 0], sizes = [8, 16], strides = [1, 1]} : vector<24x16xf32> to vector<8x16xf32>
    %c0_21 = arith.constant 0 : index
    %c0_22 = arith.constant 0 : index
    %c0_23 = arith.constant 0 : index
    %30 = vector.load %arg6[%c0_21, %c0_22, %c0_23] : memref<2x16x16xf32, #tpu.memory_space<vmem>>, vector<1x16x16xf32>
    %31 = vector.shape_cast %30 : vector<1x16x16xf32> to vector<16x16xf32>
    %cst_24 = arith.constant dense<0.000000e+00> : vector<8x16xf32>
    %32 = tpu.matmul %29, %31, %cst_24 {dimension_numbers = #tpu.dot_dimension_numbers<[1], [0], [0], [1], [0, 0, 1, 1], [], []>} : vector<8x16xf32>, vector<16x16xf32>, vector<8x16xf32> -> vector<8x16xf32>
    %33 = vector.extract_strided_slice %28 {offsets = [8, 0], sizes = [8, 16], strides = [1, 1]} : vector<24x16xf32> to vector<8x16xf32>
    %34 = arith.addf %32, %33 : vector<8x16xf32>
    %35 = vector.extract_strided_slice %28 {offsets = [16, 0], sizes = [8, 16], strides = [1, 1]} : vector<24x16xf32> to vector<8x16xf32>
    %c1_25 = arith.constant 1 : index
    %c0_26 = arith.constant 0 : index
    %c0_27 = arith.constant 0 : index
    %36 = vector.load %arg6[%c1_25, %c0_26, %c0_27] : memref<2x16x16xf32, #tpu.memory_space<vmem>>, vector<1x16x16xf32>
    %37 = vector.shape_cast %36 : vector<1x16x16xf32> to vector<16x16xf32>
    %cst_28 = arith.constant dense<0.000000e+00> : vector<8x16xf32>
    %38 = tpu.matmul %35, %37, %cst_28 {dimension_numbers = #tpu.dot_dimension_numbers<[1], [0], [0], [1], [0, 0, 1, 1], [], []>} : vector<8x16xf32>, vector<16x16xf32>, vector<8x16xf32> -> vector<8x16xf32>
    %39 = arith.addf %34, %38 : vector<8x16xf32>
    %40 = vector.broadcast %27 : vector<8x1xf32> to vector<8x16xf32>
    %41 = arith.addf %39, %40 : vector<8x16xf32>
    %42 = arith.negf %41 : vector<8x16xf32>
    %43 = math.exp %42 : vector<8x16xf32>
    %cst_29 = arith.constant 1.000000e+00 : f32
    %44 = vector.broadcast %cst_29 : f32 to vector<8x16xf32>
    %45 = arith.addf %44, %43 : vector<8x16xf32>
    %46 = arith.divf %44, %45 : vector<8x16xf32>
    %c2 = arith.constant 2 : index
    %c0_30 = arith.constant 0 : index
    %c0_31 = arith.constant 0 : index
    %47 = vector.load %arg7[%c2, %c0_30, %c0_31] : memref<4x24x8xf32, #tpu.memory_space<vmem>>, vector<1x24x8xf32>
    %48 = vector.shape_cast %47 : vector<1x24x8xf32> to vector<24x8xf32>
    %49 = vector.extract_strided_slice %5 {offsets = [0, 2], sizes = [8, 1], strides = [1, 1]} : vector<8x6xf32> to vector<8x1xf32>
    %cst_32 = arith.constant dense<0.000000e+00> : vector<24x16xf32>
    %50 = tpu.matmul %48, %3, %cst_32 {dimension_numbers = #tpu.dot_dimension_numbers<[1], [0], [0], [1], [0, 0, 1, 1], [], []>} : vector<24x8xf32>, vector<8x16xf32>, vector<24x16xf32> -> vector<24x16xf32>
    %51 = vector.extract_strided_slice %50 {offsets = [0, 0], sizes = [8, 16], strides = [1, 1]} : vector<24x16xf32> to vector<8x16xf32>
    %c0_33 = arith.constant 0 : index
    %c0_34 = arith.constant 0 : index
    %c0_35 = arith.constant 0 : index
    %52 = vector.load %arg5[%c0_33, %c0_34, %c0_35] : memref<2x16x16xf32, #tpu.memory_space<vmem>>, vector<1x16x16xf32>
    %53 = vector.shape_cast %52 : vector<1x16x16xf32> to vector<16x16xf32>
    %cst_36 = arith.constant dense<0.000000e+00> : vector<8x16xf32>
    %54 = tpu.matmul %51, %53, %cst_36 {dimension_numbers = #tpu.dot_dimension_numbers<[1], [0], [0], [1], [0, 0, 1, 1], [], []>} : vector<8x16xf32>, vector<16x16xf32>, vector<8x16xf32> -> vector<8x16xf32>
    %55 = vector.extract_strided_slice %50 {offsets = [8, 0], sizes = [8, 16], strides = [1, 1]} : vector<24x16xf32> to vector<8x16xf32>
    %56 = arith.addf %54, %55 : vector<8x16xf32>
    %57 = vector.extract_strided_slice %50 {offsets = [16, 0], sizes = [8, 16], strides = [1, 1]} : vector<24x16xf32> to vector<8x16xf32>
    %c1_37 = arith.constant 1 : index
    %c0_38 = arith.constant 0 : index
    %c0_39 = arith.constant 0 : index
    %58 = vector.load %arg5[%c1_37, %c0_38, %c0_39] : memref<2x16x16xf32, #tpu.memory_space<vmem>>, vector<1x16x16xf32>
    %59 = vector.shape_cast %58 : vector<1x16x16xf32> to vector<16x16xf32>
    %cst_40 = arith.constant dense<0.000000e+00> : vector<8x16xf32>
    %60 = tpu.matmul %57, %59, %cst_40 {dimension_numbers = #tpu.dot_dimension_numbers<[1], [0], [0], [1], [0, 0, 1, 1], [], []>} : vector<8x16xf32>, vector<16x16xf32>, vector<8x16xf32> -> vector<8x16xf32>
    %61 = arith.addf %56, %60 : vector<8x16xf32>
    %62 = vector.broadcast %49 : vector<8x1xf32> to vector<8x16xf32>
    %63 = arith.addf %61, %62 : vector<8x16xf32>
    %cst_41 = arith.constant 0.000000e+00 : f32
    %64 = vector.broadcast %cst_41 : f32 to vector<8x16xf32>
    %65 = arith.maximumf %63, %64 : vector<8x16xf32>
    %c3 = arith.constant 3 : index
    %c0_42 = arith.constant 0 : index
    %c0_43 = arith.constant 0 : index
    %66 = vector.load %arg7[%c3, %c0_42, %c0_43] : memref<4x24x8xf32, #tpu.memory_space<vmem>>, vector<1x24x8xf32>
    %67 = vector.shape_cast %66 : vector<1x24x8xf32> to vector<24x8xf32>
    %68 = vector.extract_strided_slice %5 {offsets = [0, 3], sizes = [8, 1], strides = [1, 1]} : vector<8x6xf32> to vector<8x1xf32>
    %cst_44 = arith.constant dense<0.000000e+00> : vector<24x16xf32>
    %69 = tpu.matmul %67, %65, %cst_44 {dimension_numbers = #tpu.dot_dimension_numbers<[1], [0], [0], [1], [0, 0, 1, 1], [], []>} : vector<24x8xf32>, vector<8x16xf32>, vector<24x16xf32> -> vector<24x16xf32>
    %70 = vector.extract_strided_slice %69 {offsets = [0, 0], sizes = [8, 16], strides = [1, 1]} : vector<24x16xf32> to vector<8x16xf32>
    %c0_45 = arith.constant 0 : index
    %c0_46 = arith.constant 0 : index
    %c0_47 = arith.constant 0 : index
    %71 = vector.load %arg5[%c0_45, %c0_46, %c0_47] : memref<2x16x16xf32, #tpu.memory_space<vmem>>, vector<1x16x16xf32>
    %72 = vector.shape_cast %71 : vector<1x16x16xf32> to vector<16x16xf32>
    %cst_48 = arith.constant dense<0.000000e+00> : vector<8x16xf32>
    %73 = tpu.matmul %70, %72, %cst_48 {dimension_numbers = #tpu.dot_dimension_numbers<[1], [0], [0], [1], [0, 0, 1, 1], [], []>} : vector<8x16xf32>, vector<16x16xf32>, vector<8x16xf32> -> vector<8x16xf32>
    %74 = vector.extract_strided_slice %69 {offsets = [8, 0], sizes = [8, 16], strides = [1, 1]} : vector<24x16xf32> to vector<8x16xf32>
    %75 = arith.addf %73, %74 : vector<8x16xf32>
    %76 = vector.extract_strided_slice %69 {offsets = [16, 0], sizes = [8, 16], strides = [1, 1]} : vector<24x16xf32> to vector<8x16xf32>
    %c1_49 = arith.constant 1 : index
    %c0_50 = arith.constant 0 : index
    %c0_51 = arith.constant 0 : index
    %77 = vector.load %arg5[%c1_49, %c0_50, %c0_51] : memref<2x16x16xf32, #tpu.memory_space<vmem>>, vector<1x16x16xf32>
    %78 = vector.shape_cast %77 : vector<1x16x16xf32> to vector<16x16xf32>
    %cst_52 = arith.constant dense<0.000000e+00> : vector<8x16xf32>
    %79 = tpu.matmul %76, %78, %cst_52 {dimension_numbers = #tpu.dot_dimension_numbers<[1], [0], [0], [1], [0, 0, 1, 1], [], []>} : vector<8x16xf32>, vector<16x16xf32>, vector<8x16xf32> -> vector<8x16xf32>
    %80 = arith.addf %75, %79 : vector<8x16xf32>
    %81 = vector.broadcast %68 : vector<8x1xf32> to vector<8x16xf32>
    %82 = arith.addf %80, %81 : vector<8x16xf32>
    %83 = arith.negf %82 : vector<8x16xf32>
    %84 = math.exp %83 : vector<8x16xf32>
    %cst_53 = arith.constant 1.000000e+00 : f32
    %85 = vector.broadcast %cst_53 : f32 to vector<8x16xf32>
    %86 = arith.addf %85, %84 : vector<8x16xf32>
    %87 = arith.divf %85, %86 : vector<8x16xf32>
    %c0_54 = arith.constant 0 : index
    %c0_55 = arith.constant 0 : index
    %88 = vector.load %arg3[%c0_54, %c0_55] : memref<16x256xf32, #tpu.memory_space<vmem>>, vector<16x256xf32>
    %cst_56 = arith.constant dense<0.000000e+00> : vector<8x256xf32>
    %89 = tpu.matmul %87, %88, %cst_56 {dimension_numbers = #tpu.dot_dimension_numbers<[1], [0], [0], [1], [0, 0, 1, 1], [], []>} : vector<8x16xf32>, vector<16x256xf32>, vector<8x256xf32> -> vector<8x256xf32>
    %c0_57 = arith.constant 0 : index
    %c0_58 = arith.constant 0 : index
    %90 = vector.load %arg4[%c0_57, %c0_58] : memref<16x256xf32, #tpu.memory_space<vmem>>, vector<16x256xf32>
    %cst_59 = arith.constant dense<0.000000e+00> : vector<8x256xf32>
    %91 = tpu.matmul %46, %90, %cst_59 {dimension_numbers = #tpu.dot_dimension_numbers<[1], [0], [0], [1], [0, 0, 1, 1], [], []>} : vector<8x16xf32>, vector<16x256xf32>, vector<8x256xf32> -> vector<8x256xf32>
    %92 = arith.mulf %89, %91 : vector<8x256xf32>
    %93 = vector.extract_strided_slice %5 {offsets = [0, 4], sizes = [8, 1], strides = [1, 1]} : vector<8x6xf32> to vector<8x1xf32>
    %94 = vector.broadcast %93 : vector<8x1xf32> to vector<8x256xf32>
    %95 = arith.mulf %0, %94 : vector<8x256xf32>
    %96 = vector.extract_strided_slice %5 {offsets = [0, 5], sizes = [8, 1], strides = [1, 1]} : vector<8x6xf32> to vector<8x1xf32>
    %97 = vector.broadcast %96 : vector<8x1xf32> to vector<8x256xf32>
    %98 = arith.addf %95, %97 : vector<8x256xf32>
    %99 = arith.mulf %92, %98 : vector<8x256xf32>
    %c0_60 = arith.constant 0 : index
    %c0_61 = arith.constant 0 : index
    %100 = vector.load %arg9[%c0_60, %c0_61] : memref<8x256xf32, #tpu.memory_space<vmem>>, vector<8x256xf32>
    tpu.vector_store %arg9[%c0_60, %c0_61], %99 {strides = array<i32>} : memref<8x256xf32, #tpu.memory_space<vmem>>, vector<8x256xf32>,
    return
  }
  func.func @transform_0(%arg0: i32) -> (i32, i32) {
    %c0_i32 = arith.constant 0 : i32
    %c0_i32_0 = arith.constant 0 : i32
    return %arg0, %c0_i32 : i32, i32
  }
  func.func @transform_1(%arg0: i32) -> (i32, i32) {
    %c0_i32 = arith.constant 0 : i32
    %c0_i32_0 = arith.constant 0 : i32
    %c0_i32_1 = arith.constant 0 : i32
    return %c0_i32, %c0_i32_0 : i32, i32
  }
  func.func @transform_2(%arg0: i32) -> (i32, i32) {
    %c0_i32 = arith.constant 0 : i32
    %c0_i32_0 = arith.constant 0 : i32
    %c0_i32_1 = arith.constant 0 : i32
    return %c0_i32, %c0_i32_0 : i32, i32
  }
  func.func @transform_3(%arg0: i32) -> (i32, i32) {
    %c0_i32 = arith.constant 0 : i32
    %c0_i32_0 = arith.constant 0 : i32
    %c0_i32_1 = arith.constant 0 : i32
    return %c0_i32, %c0_i32_0 : i32, i32
  }
  func.func @transform_4(%arg0: i32) -> (i32, i32, i32) {
    %c0_i32 = arith.constant 0 : i32
    %c0_i32_0 = arith.constant 0 : i32
    %c0_i32_1 = arith.constant 0 : i32
    %c0_i32_2 = arith.constant 0 : i32
    return %c0_i32, %c0_i32_0, %c0_i32_1 : i32, i32, i32
  }
  func.func @transform_5(%arg0: i32) -> (i32, i32, i32) {
    %c0_i32 = arith.constant 0 : i32
    %c0_i32_0 = arith.constant 0 : i32
    %c0_i32_1 = arith.constant 0 : i32
    %c0_i32_2 = arith.constant 0 : i32
    return %c0_i32, %c0_i32_0, %c0_i32_1 : i32, i32, i32
  }
  func.func @transform_6(%arg0: i32) -> (i32, i32, i32) {
    %c0_i32 = arith.constant 0 : i32
    %c0_i32_0 = arith.constant 0 : i32
    %c0_i32_1 = arith.constant 0 : i32
    %c0_i32_2 = arith.constant 0 : i32
    return %c0_i32, %c0_i32_0, %c0_i32_1 : i32, i32, i32
  }
  func.func @transform_7(%arg0: i32) -> (i32, i32) {
    %c0_i32 = arith.constant 0 : i32
    %c0_i32_0 = arith.constant 0 : i32
    %c0_i32_1 = arith.constant 0 : i32
    return %c0_i32, %c0_i32_0 : i32, i32
  }
  func.func @transform_8(%arg0: i32) -> (i32, i32) {
    %c0_i32 = arith.constant 0 : i32
    %c0_i32_0 = arith.constant 0 : i32
    return %arg0, %c0_i32 : i32, i32
  }
}

</mosaic_0001>

<llo_original>
// kernel: tile.53
$region0: #{tile.53}
  #allocation0 [shape = 's32[1]{0}', space=sflag, size = 0x4, scoped, tag = 'scoped memory for tile.53']
  %s0 = inlined_call_operand.vmem [shape: f32[4], index: 0, kind: input, shape index: {}]
  %s1 = inlined_call_operand.vmem [shape: f32[2,4], index: 1, kind: output, shape index: {}]
  // Predicated region
  $region2: #{tile.53} parent=0 // pred_check
    _
  $region3: #{tile.53} parent=0 // pred_check_branch
    %3 = sbr.rel (0) target = $region5
  $region4: #{tile.53} parent=0 // pred_region
    _
  $region5: #{tile.53} parent=0 // pred_fallthru
    _
  %v4 = vld [vmem:[%s0] ss:$0 sm:$0xff]
  %5 = vst [vmem:[%s1] sm:$0x3] %v4

// kernel: tile.4
$region0: #{tile.4}
  %s0 = inlined_call_operand.vmem [shape: f32[2,4], index: 0, kind: input, shape index: {}]
  %s1 = inlined_call_operand.vmem [shape: f32[8,1], index: 1, kind: output, shape index: {}]
  $region1: #{tile.4} parent=0
    #allocation0 [shape = 'u8[4096]{0}', space=vmem, size = 0x1000, scoped, tag = 'scoped mem for input reshape']
    %s3 = ssub.s32 4, 1
    %v4 = vld [vmem:[%s0] sm:%s3]
    %5 = vst [vmem:[#allocation0] sm:%s3] %v4
    %v6 = vld [vmem:[#allocation0] sm:$0x3]
    %vm7 = vcmask 7168
    %8 = vst.msk [vmem:[%s1] ss:$4 sm:$0x3] %vm7, %v6
    %v9 = vld [vmem:[#allocation0] sm:$0x3]
    %10 = vrot.lane.b32.xlu0 %v9, 127
    %v11 = vpop.permute.xlu0 %10
    %vm12 = vcmask 7168
    %s13 = scalar_lea.vmem %s1, 1
    %14 = vst.msk [vmem:[%s13] ss:$4 sm:$0x3] %vm12, %v11
    %v15 = vld [vmem:[#allocation0] sm:$0x3]
    %16 = vrot.lane.b32.xlu0 %v15, 126
    %v17 = vpop.permute.xlu0 %16
    %vm18 = vcmask 7168
    %s19 = scalar_lea.vmem %s1, 2
    %20 = vst.msk [vmem:[%s19] ss:$4 sm:$0x3] %vm18, %v17
    %v21 = vld [vmem:[#allocation0] sm:$0x3]
    %22 = vrot.lane.b32.xlu0 %v21, 125
    %v23 = vpop.permute.xlu0 %22
    %vm24 = vcmask 7168
    %s25 = scalar_lea.vmem %s1, 3
    %26 = vst.msk [vmem:[%s25] ss:$4 sm:$0x3] %vm24, %v23

// kernel: tfatten_forward.1
$region0: #{tfatten_forward.1}
  #allocation0 [shape = 'u32[]', space=smem, size = 0x4, offset = 0x4, fixed_abs, tag = 'smem constant byte address 0x4 - core index']
  #allocation1 [shape = 'u32[72,128]{1,0:T(1,128)}', space=vmem, size = 0x9000, scoped, tag = 'internal scratch']
  %s0 = inlined_call_operand.vmem [shape: f32[16,256], index: 0, kind: input, shape index: {}]
  %s1 = inlined_call_operand.vmem [shape: f32[256,32], index: 1, kind: input, shape index: {}]
  %s2 = inlined_call_operand.vmem [shape: f32[16,256], index: 2, kind: input, shape index: {}]
  %s3 = inlined_call_operand.vmem [shape: f32[16,256], index: 3, kind: input, shape index: {}]
  %s4 = inlined_call_operand.vmem [shape: f32[2,16,16], index: 4, kind: input, shape index: {}, may-alias: {4,5}]
  %s5 = inlined_call_operand.vmem [shape: f32[2,16,16], index: 5, kind: input, shape index: {}, may-alias: {4,5}]
  %s6 = inlined_call_operand.vmem [shape: f32[4,24,8], index: 6, kind: input, shape index: {}]
  %s7 = inlined_call_operand.vmem [shape: f32[8,6], index: 7, kind: input, shape index: {}]
  %s8 = inlined_call_operand.vmem [shape: f32[16,256], index: 8, kind: output, shape index: {}]
  %s9 = sld [smem:[#allocation0]]
  $region65: #{tfatten_forward.1} parent=0
    _
  %s11 = ssub.s32 1, %s9
  %s12 = scalar_select 0, %s11, %s9
  loop: start=0, step=1, limit=4
  $region2: #{tfatten_forward.1} parent=0 // loop_pre_header
    _
  $region3: #{tfatten_forward.1} parent=0 // loop_header
    %s14 = sphi 0, %s18
    %p15 = scmp.ge.s32.totalorder %s14, 4
    %s24 = sphi 0, %s26
    %s27 = sphi 0, %s24
    %s28 = sphi 0, %s27
    %s44 = sphi 0, %s28
    %s48 = sphi 0, %s48
    %s50 = sphi 0, %s48
    %s51 = sphi 0, %s50
    %s65 = sphi 0, %s51
    %s69 = sphi 0, %s69
    %s71 = sphi 0, %s69
    %s72 = sphi 0, %s71
    %s86 = sphi 0, %s72
    %s90 = sphi 0, %s90
    %s92 = sphi 0, %s90
    %s93 = sphi 0, %s92
    %s107 = sphi 0, %s93
    %s111 = sphi 0, %s111
    %s113 = sphi 0, %s111
    %s114 = sphi 0, %s113
    %s128 = sphi 0, %s114
    %s132 = sphi 0, %s132
    %s134 = sphi 0, %s132
    %s135 = sphi 0, %s134
    %s149 = sphi 0, %s135
    %s153 = sphi 0, %s153
    %s155 = sphi 0, %s153
    %s156 = sphi 0, %s155
    %s170 = sphi 0, %s156
    %s174 = sphi 0, %s174
    %s176 = sphi 0, %s174
    %s177 = sphi 0, %s176
    %s191 = sphi 0, %s177
    %s197 = sphi 0, %s199
    %s200 = sphi 0, %s197
    %s201 = sphi 0, %s200
    %s217 = sphi 0, %s201
  $region4: #{tfatten_forward.1} parent=0 // loop_header_branch
    %17 = sbr.rel (%p15) target = $region8
  $region5: #{tfatten_forward.1} parent=0 // loop_body
    %s19 = ssub.s32 %s14, 1
    %s20 = ssub.s32 %s14, 2
    %s21 = sadd.s32 %s14, 1
    %s22 = ssub.s32 %s14, %s21
    %p23 = scmp.eq.s32.totalorder %s22, 0
    %s25 = sadd.s32 %s24, 1
    %s26 = scalar_select %p23, %s24, %s25
    %p29 = pneg %p23
    %p30 = scmp.eq.s32.totalorder %s14, 1
    %p31 = por %p29, %p30
    %p32 = scmp.ne.s32.totalorder %s24, %s27
    %p33 = scmp.eq.s32.totalorder %s14, 0
    %p34 = por %p32, %p33
    %p35 = scmp.ne.s32.totalorder %s24, %s27
    %p36 = scmp.eq.s32.totalorder %s19, 1
    %p37 = por %p35, %p36
    %p38 = scmp.ne.s32.totalorder %s27, %s28
    %p39 = scmp.eq.s32.totalorder %s19, 0
    %p40 = por %p38, %p39
    %p41 = scmp.ne.s32.totalorder %s27, %s28
    %p42 = scmp.eq.s32.totalorder %s20, 1
    %p43 = por %p41, %p42
    %p45 = scmp.ne.s32.totalorder %s28, %s44
    %p46 = scmp.eq.s32.totalorder %s20, 0
    %p47 = por %p45, %p46
    %s49 = sadd.s32 %s48, 1
    %p52 = scmp.eq.s32.totalorder %s14, 1
    %p53 = scmp.ne.s32.totalorder %s48, %s50
    %p54 = scmp.eq.s32.totalorder %s14, 0
    %p55 = por %p53, %p54
    %p56 = scmp.ne.s32.totalorder %s48, %s50
    %p57 = scmp.eq.s32.totalorder %s19, 1
    %p58 = por %p56, %p57
    %p59 = scmp.ne.s32.totalorder %s50, %s51
    %p60 = scmp.eq.s32.totalorder %s19, 0
    %p61 = por %p59, %p60
    %p62 = scmp.ne.s32.totalorder %s50, %s51
    %p63 = scmp.eq.s32.totalorder %s20, 1
    %p64 = por %p62, %p63
    %p66 = scmp.ne.s32.totalorder %s51, %s65
    %p67 = scmp.eq.s32.totalorder %s20, 0
    %p68 = por %p66, %p67
    %s70 = sadd.s32 %s69, 1
    %p73 = scmp.eq.s32.totalorder %s14, 1
    %p74 = scmp.ne.s32.totalorder %s69, %s71
    %p75 = scmp.eq.s32.totalorder %s14, 0
    %p76 = por %p74, %p75
    %p77 = scmp.ne.s32.totalorder %s69, %s71
    %p78 = scmp.eq.s32.totalorder %s19, 1
    %p79 = por %p77, %p78
    %p80 = scmp.ne.s32.totalorder %s71, %s72
    %p81 = scmp.eq.s32.totalorder %s19, 0
    %p82 = por %p80, %p81
    %p83 = scmp.ne.s32.totalorder %s71, %s72
    %p84 = scmp.eq.s32.totalorder %s20, 1
    %p85 = por %p83, %p84
    %p87 = scmp.ne.s32.totalorder %s72, %s86
    %p88 = scmp.eq.s32.totalorder %s20, 0
    %p89 = por %p87, %p88
    %s91 = sadd.s32 %s90, 1
    %p94 = scmp.eq.s32.totalorder %s14, 1
    %p95 = scmp.ne.s32.totalorder %s90, %s92
    %p96 = scmp.eq.s32.totalorder %s14, 0
    %p97 = por %p95, %p96
    %p98 = scmp.ne.s32.totalorder %s90, %s92
    %p99 = scmp.eq.s32.totalorder %s19, 1
    %p100 = por %p98, %p99
    %p101 = scmp.ne.s32.totalorder %s92, %s93
    %p102 = scmp.eq.s32.totalorder %s19, 0
    %p103 = por %p101, %p102
    %p104 = scmp.ne.s32.totalorder %s92, %s93
    %p105 = scmp.eq.s32.totalorder %s20, 1
    %p106 = por %p104, %p105
    %p108 = scmp.ne.s32.totalorder %s93, %s107
    %p109 = scmp.eq.s32.totalorder %s20, 0
    %p110 = por %p108, %p109
    %s112 = sadd.s32 %s111, 1
    %p115 = scmp.eq.s32.totalorder %s14, 1
    %p116 = scmp.ne.s32.totalorder %s111, %s113
    %p117 = scmp.eq.s32.totalorder %s14, 0
    %p118 = por %p116, %p117
    %p119 = scmp.ne.s32.totalorder %s111, %s113
    %p120 = scmp.eq.s32.totalorder %s19, 1
    %p121 = por %p119, %p120
    %p122 = scmp.ne.s32.totalorder %s113, %s114
    %p123 = scmp.eq.s32.totalorder %s19, 0
    %p124 = por %p122, %p123
    %p125 = scmp.ne.s32.totalorder %s113, %s114
    %p126 = scmp.eq.s32.totalorder %s20, 1
    %p127 = por %p125, %p126
    %p129 = scmp.ne.s32.totalorder %s114, %s128
    %p130 = scmp.eq.s32.totalorder %s20, 0
    %p131 = por %p129, %p130
    %s133 = sadd.s32 %s132, 1
    %p136 = scmp.eq.s32.totalorder %s14, 1
    %p137 = scmp.ne.s32.totalorder %s132, %s134
    %p138 = scmp.eq.s32.totalorder %s14, 0
    %p139 = por %p137, %p138
    %p140 = scmp.ne.s32.totalorder %s132, %s134
    %p141 = scmp.eq.s32.totalorder %s19, 1
    %p142 = por %p140, %p141
    %p143 = scmp.ne.s32.totalorder %s134, %s135
    %p144 = scmp.eq.s32.totalorder %s19, 0
    %p145 = por %p143, %p144
    %p146 = scmp.ne.s32.totalorder %s134, %s135
    %p147 = scmp.eq.s32.totalorder %s20, 1
    %p148 = por %p146, %p147
    %p150 = scmp.ne.s32.totalorder %s135, %s149
    %p151 = scmp.eq.s32.totalorder %s20, 0
    %p152 = por %p150, %p151
    %s154 = sadd.s32 %s153, 1
    %p157 = scmp.eq.s32.totalorder %s14, 1
    %p158 = scmp.ne.s32.totalorder %s153, %s155
    %p159 = scmp.eq.s32.totalorder %s14, 0
    %p160 = por %p158, %p159
    %p161 = scmp.ne.s32.totalorder %s153, %s155
    %p162 = scmp.eq.s32.totalorder %s19, 1
    %p163 = por %p161, %p162
    %p164 = scmp.ne.s32.totalorder %s155, %s156
    %p165 = scmp.eq.s32.totalorder %s19, 0
    %p166 = por %p164, %p165
    %p167 = scmp.ne.s32.totalorder %s155, %s156
    %p168 = scmp.eq.s32.totalorder %s20, 1
    %p169 = por %p167, %p168
    %p171 = scmp.ne.s32.totalorder %s156, %s170
    %p172 = scmp.eq.s32.totalorder %s20, 0
    %p173 = por %p171, %p172
    %s175 = sadd.s32 %s174, 1
    %p178 = scmp.eq.s32.totalorder %s14, 1
    %p179 = scmp.ne.s32.totalorder %s174, %s176
    %p180 = scmp.eq.s32.totalorder %s14, 0
    %p181 = por %p179, %p180
    %p182 = scmp.ne.s32.totalorder %s174, %s176
    %p183 = scmp.eq.s32.totalorder %s19, 1
    %p184 = por %p182, %p183
    %p185 = scmp.ne.s32.totalorder %s176, %s177
    %p186 = scmp.eq.s32.totalorder %s19, 0
    %p187 = por %p185, %p186
    %p188 = scmp.ne.s32.totalorder %s176, %s177
    %p189 = scmp.eq.s32.totalorder %s20, 1
    %p190 = por %p188, %p189
    %p192 = scmp.ne.s32.totalorder %s177, %s191
    %p193 = scmp.eq.s32.totalorder %s20, 0
    %p194 = por %p192, %p193
    %s195 = ssub.s32 %s14, %s21
    %p196 = scmp.eq.s32.totalorder %s195, 0
    %s198 = sadd.s32 %s197, 1
    %s199 = scalar_select %p196, %s197, %s198
    %p202 = pneg %p196
    %p203 = scmp.eq.s32.totalorder %s14, 1
    %p204 = por %p202, %p203
    %p205 = scmp.ne.s32.totalorder %s197, %s200
    %p206 = scmp.eq.s32.totalorder %s14, 0
    %p207 = por %p205, %p206
    %p208 = scmp.ne.s32.totalorder %s197, %s200
    %p209 = scmp.eq.s32.totalorder %s19, 1
    %p210 = por %p208, %p209
    %p211 = scmp.ne.s32.totalorder %s200, %s201
    %p212 = scmp.eq.s32.totalorder %s19, 0
    %p213 = por %p211, %p212
    %p214 = scmp.ne.s32.totalorder %s200, %s201
    %p215 = scmp.eq.s32.totalorder %s20, 1
    %p216 = por %p214, %p215
    %p218 = scmp.ne.s32.totalorder %s201, %s217
    %p219 = scmp.eq.s32.totalorder %s20, 0
    %p220 = por %p218, %p219
    %p221 = scmp.le.s32.totalorder 1, %s14
    %p222 = scmp.lt.s32.totalorder %s14, 3
    %p223 = pnand %p221, %p222
    %p224 = pneg %p223
    // Predicated region
    $region9: #{tfatten_forward.1} parent=5 // pred_check
      _
    $region10: #{tfatten_forward.1} parent=5 // pred_check_branch
      %226 = sbr.rel (%p223) target = $region12
    $region11: #{tfatten_forward.1} parent=5 // pred_region
      %s227 = ssub.s32 %s14, 1
      // Predicated region
      $region13: #{tfatten_forward.1} parent=11 // pred_check
        %p228 = pneg %p61
      $region14: #{tfatten_forward.1} parent=11 // pred_check_branch
        %230 = sbr.rel (%p228) target = $region16
      $region15: #{tfatten_forward.1} parent=11 // pred_region
        _
      $region16: #{tfatten_forward.1} parent=11 // pred_fallthru
        _
      // Predicated region
      $region17: #{tfatten_forward.1} parent=11 // pred_check
        %p231 = pneg %p82
      $region18: #{tfatten_forward.1} parent=11 // pred_check_branch
        %233 = sbr.rel (%p231) target = $region20
      $region19: #{tfatten_forward.1} parent=11 // pred_region
        _
      $region20: #{tfatten_forward.1} parent=11 // pred_fallthru
        _
      // Predicated region
      $region21: #{tfatten_forward.1} parent=11 // pred_check
        %p234 = pneg %p103
      $region22: #{tfatten_forward.1} parent=11 // pred_check_branch
        %236 = sbr.rel (%p234) target = $region24
      $region23: #{tfatten_forward.1} parent=11 // pred_region
        _
      $region24: #{tfatten_forward.1} parent=11 // pred_fallthru
        _
      // Predicated region
      $region25: #{tfatten_forward.1} parent=11 // pred_check
        %p237 = pneg %p124
      $region26: #{tfatten_forward.1} parent=11 // pred_check_branch
        %239 = sbr.rel (%p237) target = $region28
      $region27: #{tfatten_forward.1} parent=11 // pred_region
        _
      $region28: #{tfatten_forward.1} parent=11 // pred_fallthru
        _
      // Predicated region
      $region29: #{tfatten_forward.1} parent=11 // pred_check
        %p240 = pneg %p145
      $region30: #{tfatten_forward.1} parent=11 // pred_check_branch
        %242 = sbr.rel (%p240) target = $region32
      $region31: #{tfatten_forward.1} parent=11 // pred_region
        _
      $region32: #{tfatten_forward.1} parent=11 // pred_fallthru
        _
      // Predicated region
      $region33: #{tfatten_forward.1} parent=11 // pred_check
        %p243 = pneg %p166
      $region34: #{tfatten_forward.1} parent=11 // pred_check_branch
        %245 = sbr.rel (%p243) target = $region36
      $region35: #{tfatten_forward.1} parent=11 // pred_region
        _
      $region36: #{tfatten_forward.1} parent=11 // pred_fallthru
        _
      // Predicated region
      $region37: #{tfatten_forward.1} parent=11 // pred_check
        %p246 = pneg %p187
      $region38: #{tfatten_forward.1} parent=11 // pred_check_branch
        %248 = sbr.rel (%p246) target = $region40
      $region39: #{tfatten_forward.1} parent=11 // pred_region
        _
      $region40: #{tfatten_forward.1} parent=11 // pred_fallthru
        _
    $region12: #{tfatten_forward.1} parent=5 // pred_fallthru
      _
    %p249 = scmp.lt.s32.totalorder %s14, 2
    // Predicated region
    $region41: #{tfatten_forward.1} parent=5 // pred_check
      %p250 = pneg %p249
    $region42: #{tfatten_forward.1} parent=5 // pred_check_branch
      %252 = sbr.rel (%p250) target = $region44
    $region43: #{tfatten_forward.1} parent=5 // pred_region
      // Predicated region
      $region45: #{tfatten_forward.1} parent=43 // pred_check
        %p253 = pneg %p34
      $region46: #{tfatten_forward.1} parent=43 // pred_check_branch
        %255 = sbr.rel (%p253) target = $region48
      $region47: #{tfatten_forward.1} parent=43 // pred_region
        %p256 = scmp.lt.s32.totalorder %s14, 1
        %s257 = scalar_select %p256, %s14, 1
        %s258 = smul.addr %s257, 2
        %s259 = smul.addr %s258, 8
        %s260 = scalar_lea.vmem %s0, %s259
      $region48: #{tfatten_forward.1} parent=43 // pred_fallthru
        _
    $region44: #{tfatten_forward.1} parent=5 // pred_fallthru
      _
    %p261 = scmp.le.s32.totalorder 1, %s14
    %p262 = scmp.lt.s32.totalorder %s14, 3
    %p263 = pnand %p261, %p262
    %p264 = pneg %p263
    // Predicated region
    $region49: #{tfatten_forward.1} parent=5 // pred_check
      _
    $region50: #{tfatten_forward.1} parent=5 // pred_check_branch
      %266 = sbr.rel (%p263) target = $region52
    $region51: #{tfatten_forward.1} parent=5 // pred_region
      %s267 = ssub.s32 %s14, 1
      %p268 = scmp.lt.s32.totalorder %s19, 1
      %s269 = scalar_select %p268, %s19, 1
      %s270 = smul.addr %s269, 2
      %s271 = smul.addr %s270, 8
      %s272 = scalar_lea.vmem %s0, %s271
      %p273 = pneg %p40
      %p274 = pneg %p37
      %p275 = pneg %p61
      %p276 = pneg %p58
      %p277 = pneg %p82
      %p278 = pneg %p79
      %p279 = pneg %p103
      %p280 = pneg %p100
      %p281 = pneg %p124
      %p282 = pneg %p121
      %p283 = pneg %p145
      %p284 = pneg %p142
      %p285 = pneg %p166
      %p286 = pneg %p163
      %p287 = pneg %p187
      %p288 = pneg %p184
      %p289 = pneg %p213
      %p290 = pneg %p210
      %p291 = scmp.lt.s32.totalorder %s19, 1
      %s292 = scalar_select %p291, %s19, 1
      %s293 = smul.addr %s292, 2
      %s294 = smul.addr %s293, 8
      %s295 = scalar_lea.vmem %s8, %s294
      %p296 = scmp.lt.s32.totalorder %s19, 1
      %s297 = scalar_select %p296, %s19, 1
      %s298 = smul.addr %s297, 2
      %s299 = smul.addr %s298, 8
      %s300 = scalar_lea.vmem %s0, %s299
      %p301 = scmp.lt.s32.totalorder %s19, 1
      %s302 = scalar_select %p301, %s19, 1
      %s303 = smul.addr %s302, 2
      %s304 = smul.addr %s303, 8
      %s305 = scalar_lea.vmem %s8, %s304
      %v306 = vld [vmem:[%s300] sm:$0xff]
      %v307 = vld [vmem:[%s300 + $0x8] sm:$0xff]
      %v308 = vld [vmem:[%s1] sm:$0xff]
      %v309 = vld [vmem:[%s1 + $0x8] sm:$0xff]
      %v310 = vld [vmem:[%s1 + $0x10] sm:$0xff]
      %v311 = vld [vmem:[%s1 + $0x18] sm:$0xff]
      %v312 = vld [vmem:[%s1 + $0x20] sm:$0xff]
      %v313 = vld [vmem:[%s1 + $0x28] sm:$0xff]
      %v314 = vld [vmem:[%s1 + $0x30] sm:$0xff]
      %v315 = vld [vmem:[%s1 + $0x38] sm:$0xff]
      %v316 = vld [vmem:[%s1 + $0x40] sm:$0xff]
      %v317 = vld [vmem:[%s1 + $0x48] sm:$0xff]
      %v318 = vld [vmem:[%s1 + $0x50] sm:$0xff]
      %v319 = vld [vmem:[%s1 + $0x58] sm:$0xff]
      %v320 = vld [vmem:[%s1 + $0x60] sm:$0xff]
      %v321 = vld [vmem:[%s1 + $0x68] sm:$0xff]
      %v322 = vld [vmem:[%s1 + $0x70] sm:$0xff]
      %v323 = vld [vmem:[%s1 + $0x78] sm:$0xff]
      %v324 = vld [vmem:[%s1 + $0x80] sm:$0xff]
      %v325 = vld [vmem:[%s1 + $0x88] sm:$0xff]
      %v326 = vld [vmem:[%s1 + $0x90] sm:$0xff]
      %v327 = vld [vmem:[%s1 + $0x98] sm:$0xff]
      %v328 = vld [vmem:[%s1 + $0xa0] sm:$0xff]
      %v329 = vld [vmem:[%s1 + $0xa8] sm:$0xff]
      %v330 = vld [vmem:[%s1 + $0xb0] sm:$0xff]
      %v331 = vld [vmem:[%s1 + $0xb8] sm:$0xff]
      %v332 = vld [vmem:[%s1 + $0xc0] sm:$0xff]
      %v333 = vld [vmem:[%s1 + $0xc8] sm:$0xff]
      %v334 = vld [vmem:[%s1 + $0xd0] sm:$0xff]
      %v335 = vld [vmem:[%s1 + $0xd8] sm:$0xff]
      %v336 = vld [vmem:[%s1 + $0xe0] sm:$0xff]
      %v337 = vld [vmem:[%s1 + $0xe8] sm:$0xff]
      %v338 = vld [vmem:[%s1 + $0xf0] sm:$0xff]
      %v339 = vld [vmem:[%s1 + $0xf8] sm:$0xff]
      %340 = vmatpush.msra.mxu0 %v323
      %341 = vmatpush.msra.mxu0 %v322
      %342 = vmatpush.msra.mxu0 %v321
      %343 = vmatpush.msra.mxu0 %v320
      %344 = vmatpush.msra.mxu0 %v319
      %345 = vmatpush.msra.mxu0 %v318
      %346 = vmatpush.msra.mxu0 %v317
      %347 = vmatpush.msra.mxu0 %v316
      %348 = vmatpush.msra.mxu0 %v315
      %349 = vmatpush.msra.mxu0 %v314
      %350 = vmatpush.msra.mxu0 %v313
      %351 = vmatpush.msra.mxu0 %v312
      %352 = vmatpush.msra.mxu0 %v311
      %353 = vmatpush.msra.mxu0 %v310
      %354 = vmatpush.msra.mxu0 %v309
      %355 = vmatpush.msra.mxu0 %v308
      %356 = vmatmul.f32.gmra.mxu0 %v306
      %v357 = vpop.f32.mrf.mxu0
      %v358 = vadd.f32 0.0, %v357
      %359 = vdwg.mxu0
      %360 = vmatpush.msra.mxu0 %v339
      %361 = vmatpush.msra.mxu0 %v338
      %362 = vmatpush.msra.mxu0 %v337
      %363 = vmatpush.msra.mxu0 %v336
      %364 = vmatpush.msra.mxu0 %v335
      %365 = vmatpush.msra.mxu0 %v334
      %366 = vmatpush.msra.mxu0 %v333
      %367 = vmatpush.msra.mxu0 %v332
      %368 = vmatpush.msra.mxu0 %v331
      %369 = vmatpush.msra.mxu0 %v330
      %370 = vmatpush.msra.mxu0 %v329
      %371 = vmatpush.msra.mxu0 %v328
      %372 = vmatpush.msra.mxu0 %v327
      %373 = vmatpush.msra.mxu0 %v326
      %374 = vmatpush.msra.mxu0 %v325
      %375 = vmatpush.msra.mxu0 %v324
      %376 = vmatmul.f32.gmra.mxu0 %v307
      %v377 = vpop.f32.mrf.mxu0
      %v378 = vadd.f32 %v358, %v377
      %379 = vdwg.mxu0
      %v380 = vld [vmem:[%s7] sm:$0xff]
      %v381 = vld [vmem:[%s6] sm:$0xff]
      %v382 = vld [vmem:[%s6 + $0x8] sm:$0xff]
      %v383 = vld [vmem:[%s6 + $0x10] sm:$0xff]
      %385 = vrot.lane.b32.xlu0 %v378, 112
      %v386 = vpop.permute.xlu0 %385
      %vm388 = vcmask 64512
      %v390 = vsel %vm388, %v381, 0
      %v393 = vsel %vm388, %v382, 0
      %v396 = vsel %vm388, %v383, 0
      %398 = vmatpush.msra.mxu0 0.0
      %399 = vmatpush.msra.mxu0 0.0
      %400 = vmatpush.msra.mxu0 0.0
      %401 = vmatpush.msra.mxu0 0.0
      %402 = vmatpush.msra.mxu0 0.0
      %403 = vmatpush.msra.mxu0 0.0
      %404 = vmatpush.msra.mxu0 0.0
      %405 = vmatpush.msra.mxu0 0.0
      %406 = vmatpush.msra.mxu0 0.0
      %407 = vmatpush.msra.mxu0 0.0
      %408 = vmatpush.msra.mxu0 0.0
      %409 = vmatpush.msra.mxu0 0.0
      %410 = vmatpush.msra.mxu0 0.0
      %411 = vmatpush.msra.mxu0 0.0
      %412 = vmatpush.msra.mxu0 0.0
      %413 = vmatpush.msra.mxu0 %v386
      %414 = vmatmul.f32.gmra.mxu0 %v390
      %v415 = vpop.f32.mrf.mxu0
      %v416 = vadd.f32 0.0, %v415
      %417 = vmatmul.f32.gmra.mxu0 %v393
      %v418 = vpop.f32.mrf.mxu0
      %v419 = vadd.f32 0.0, %v418
      %420 = vmatmul.f32.gmra.mxu0 %v396
      %v421 = vpop.f32.mrf.mxu0
      %v422 = vadd.f32 0.0, %v421
      %423 = vdwg.mxu0
      %v424 = vld [vmem:[%s5] sm:$0xff]
      %v425 = vld [vmem:[%s5 + $0x8] sm:$0xff]
      %vm426 = vcmask 130048
      %v428 = vsel %vm426, %v416, 0
      %430 = vmatpush.msra.mxu0 0.0
      %431 = vmatpush.msra.mxu0 0.0
      %432 = vmatpush.msra.mxu0 0.0
      %433 = vmatpush.msra.mxu0 0.0
      %434 = vmatpush.msra.mxu0 0.0
      %435 = vmatpush.msra.mxu0 0.0
      %436 = vmatpush.msra.mxu0 0.0
      %437 = vmatpush.msra.mxu0 0.0
      %438 = vmatpush.msra.mxu0 0.0
      %439 = vmatpush.msra.mxu0 0.0
      %440 = vmatpush.msra.mxu0 0.0
      %441 = vmatpush.msra.mxu0 0.0
      %442 = vmatpush.msra.mxu0 0.0
      %443 = vmatpush.msra.mxu0 0.0
      %444 = vmatpush.msra.mxu0 %v425
      %445 = vmatpush.msra.mxu0 %v424
      %446 = vmatmul.f32.gmra.mxu0 %v428
      %v447 = vpop.f32.mrf.mxu0
      %v448 = vadd.f32 %v419, %v447
      %449 = vdwg.mxu0
      %s450 = scalar_lea.vmem %s5, 16
      %v451 = vld [vmem:[%s450] sm:$0xff]
      %v452 = vld [vmem:[%s450 + $0x8] sm:$0xff]
      %v454 = vsel %vm426, %v422, 0
      %456 = vmatpush.msra.mxu0 0.0
      %457 = vmatpush.msra.mxu0 0.0
      %458 = vmatpush.msra.mxu0 0.0
      %459 = vmatpush.msra.mxu0 0.0
      %460 = vmatpush.msra.mxu0 0.0
      %461 = vmatpush.msra.mxu0 0.0
      %462 = vmatpush.msra.mxu0 0.0
      %463 = vmatpush.msra.mxu0 0.0
      %464 = vmatpush.msra.mxu0 0.0
      %465 = vmatpush.msra.mxu0 0.0
      %466 = vmatpush.msra.mxu0 0.0
      %467 = vmatpush.msra.mxu0 0.0
      %468 = vmatpush.msra.mxu0 0.0
      %469 = vmatpush.msra.mxu0 0.0
      %470 = vmatpush.msra.mxu0 %v452
      %471 = vmatpush.msra.mxu0 %v451
      %472 = vmatmul.f32.gmra.mxu0 %v454
      %v473 = vpop.f32.mrf.mxu0
      %v474 = vadd.f32 0.0, %v473
      %475 = vdwg.mxu0
      %v476 = vadd.f32 %v448, %v474
      %478 = vset.pattern.permute.xlu0 0
      %479 = vperm.xlu0 %478, %v380
      %v480 = vpop.permute.xlu0 %479
      %v482 = vadd.f32 %v476, %v480
      %v483 = vmax.f32 %v482, 0.0
      %s484 = scalar_lea.vmem %s6, 24
      %v485 = vld [vmem:[%s484] sm:$0xff]
      %v486 = vld [vmem:[%s484 + $0x8] sm:$0xff]
      %v487 = vld [vmem:[%s484 + $0x10] sm:$0xff]
      %v489 = vsel %vm388, %v485, 0
      %v492 = vsel %vm388, %v486, 0
      %v495 = vsel %vm388, %v487, 0
      %497 = vmatpush.msra.mxu0 0.0
      %498 = vmatpush.msra.mxu0 0.0
      %499 = vmatpush.msra.mxu0 0.0
      %500 = vmatpush.msra.mxu0 0.0
      %501 = vmatpush.msra.mxu0 0.0
      %502 = vmatpush.msra.mxu0 0.0
      %503 = vmatpush.msra.mxu0 0.0
      %504 = vmatpush.msra.mxu0 0.0
      %505 = vmatpush.msra.mxu0 0.0
      %506 = vmatpush.msra.mxu0 0.0
      %507 = vmatpush.msra.mxu0 0.0
      %508 = vmatpush.msra.mxu0 0.0
      %509 = vmatpush.msra.mxu0 0.0
      %510 = vmatpush.msra.mxu0 0.0
      %511 = vmatpush.msra.mxu0 0.0
      %512 = vmatpush.msra.mxu0 %v483
      %513 = vmatmul.f32.gmra.mxu0 %v489
      %v514 = vpop.f32.mrf.mxu0
      %v515 = vadd.f32 0.0, %v514
      %516 = vmatmul.f32.gmra.mxu0 %v492
      %v517 = vpop.f32.mrf.mxu0
      %v518 = vadd.f32 0.0, %v517
      %519 = vmatmul.f32.gmra.mxu0 %v495
      %v520 = vpop.f32.mrf.mxu0
      %v521 = vadd.f32 0.0, %v520
      %522 = vdwg.mxu0
      %v524 = vsel %vm426, %v515, 0
      %526 = vmatpush.msra.mxu0 0.0
      %527 = vmatpush.msra.mxu0 0.0
      %528 = vmatpush.msra.mxu0 0.0
      %529 = vmatpush.msra.mxu0 0.0
      %530 = vmatpush.msra.mxu0 0.0
      %531 = vmatpush.msra.mxu0 0.0
      %532 = vmatpush.msra.mxu0 0.0
      %533 = vmatpush.msra.mxu0 0.0
      %534 = vmatpush.msra.mxu0 0.0
      %535 = vmatpush.msra.mxu0 0.0
      %536 = vmatpush.msra.mxu0 0.0
      %537 = vmatpush.msra.mxu0 0.0
      %538 = vmatpush.msra.mxu0 0.0
      %539 = vmatpush.msra.mxu0 0.0
      %540 = vmatpush.msra.mxu0 %v425
      %541 = vmatpush.msra.mxu0 %v424
      %542 = vmatmul.f32.gmra.mxu0 %v524
      %v543 = vpop.f32.mrf.mxu0
      %v544 = vadd.f32 %v518, %v543
      %545 = vdwg.mxu0
      %v547 = vsel %vm426, %v521, 0
      %549 = vmatpush.msra.mxu0 0.0
      %550 = vmatpush.msra.mxu0 0.0
      %551 = vmatpush.msra.mxu0 0.0
      %552 = vmatpush.msra.mxu0 0.0
      %553 = vmatpush.msra.mxu0 0.0
      %554 = vmatpush.msra.mxu0 0.0
      %555 = vmatpush.msra.mxu0 0.0
      %556 = vmatpush.msra.mxu0 0.0
      %557 = vmatpush.msra.mxu0 0.0
      %558 = vmatpush.msra.mxu0 0.0
      %559 = vmatpush.msra.mxu0 0.0
      %560 = vmatpush.msra.mxu0 0.0
      %561 = vmatpush.msra.mxu0 0.0
      %562 = vmatpush.msra.mxu0 0.0
      %563 = vmatpush.msra.mxu0 %v452
      %564 = vmatpush.msra.mxu0 %v451
      %565 = vmatmul.f32.gmra.mxu0 %v547
      %v566 = vpop.f32.mrf.mxu0
      %v567 = vadd.f32 0.0, %v566
      %568 = vdwg.mxu0
      %v569 = vadd.f32 %v544, %v567
      %570 = vset.pattern.permute.xlu0 1
      %571 = vperm.xlu0 %570, %v380
      %v572 = vpop.permute.xlu0 %571
      %v574 = vadd.f32 %v569, %v572
      %v575 = vxor.u32 %v574, 2147483648
      %v576 = vmul.f32 %v575, 1.442695
      %v577 = vpow.pop %v576
      %v578 = vadd.f32 %v577, 1.0
      %v579 = vrcp.pop %v578
      %v580 = vmul.f32 %v578, %v579
      %v581 = vsub.f32 1.0, %v580
      %v582 = vmul.f32 %v579, %v581
      %v583 = vadd.f32 %v579, %v582
      %vm584 = vweird.f32 %v578
      %vm585 = vweird.f32 %v579
      %vm586 = vmor %vm584, %vm585
      %v587 = vsel %vm586, %v579, %v583
      %v588 = vand.u32 2147483647, %v578
      %vm589 = vcmp.eq.f32.partialorder %v588, 8.507059e+37
      %v590 = vand.u32 %v578, 2147483648
      %v591 = vor.u32 1.1754944e-38, %v590
      %v592 = vsel %vm589, %v591, %v587
      %v593 = vmul.f32 1.0, %v592
      %s594 = scalar_lea.vmem %s6, 48
      %v595 = vld [vmem:[%s594] sm:$0xff]
      %v596 = vld [vmem:[%s594 + $0x8] sm:$0xff]
      %v597 = vld [vmem:[%s594 + $0x10] sm:$0xff]
      %v599 = vsel %vm388, %v595, 0
      %v602 = vsel %vm388, %v596, 0
      %v605 = vsel %vm388, %v597, 0
      %607 = vmatpush.msra.mxu0 0.0
      %608 = vmatpush.msra.mxu0 0.0
      %609 = vmatpush.msra.mxu0 0.0
      %610 = vmatpush.msra.mxu0 0.0
      %611 = vmatpush.msra.mxu0 0.0
      %612 = vmatpush.msra.mxu0 0.0
      %613 = vmatpush.msra.mxu0 0.0
      %614 = vmatpush.msra.mxu0 0.0
      %615 = vmatpush.msra.mxu0 0.0
      %616 = vmatpush.msra.mxu0 0.0
      %617 = vmatpush.msra.mxu0 0.0
      %618 = vmatpush.msra.mxu0 0.0
      %619 = vmatpush.msra.mxu0 0.0
      %620 = vmatpush.msra.mxu0 0.0
      %621 = vmatpush.msra.mxu0 0.0
      %622 = vmatpush.msra.mxu0 %v378
      %623 = vmatmul.f32.gmra.mxu0 %v599
      %v624 = vpop.f32.mrf.mxu0
      %v625 = vadd.f32 0.0, %v624
      %626 = vmatmul.f32.gmra.mxu0 %v602
      %v627 = vpop.f32.mrf.mxu0
      %v628 = vadd.f32 0.0, %v627
      %629 = vmatmul.f32.gmra.mxu0 %v605
      %v630 = vpop.f32.mrf.mxu0
      %v631 = vadd.f32 0.0, %v630
      %632 = vdwg.mxu0
      %v633 = vld [vmem:[%s4] sm:$0xff]
      %v634 = vld [vmem:[%s4 + $0x8] sm:$0xff]
      %v636 = vsel %vm426, %v625, 0
      %638 = vmatpush.msra.mxu0 0.0
      %639 = vmatpush.msra.mxu0 0.0
      %640 = vmatpush.msra.mxu0 0.0
      %641 = vmatpush.msra.mxu0 0.0
      %642 = vmatpush.msra.mxu0 0.0
      %643 = vmatpush.msra.mxu0 0.0
      %644 = vmatpush.msra.mxu0 0.0
      %645 = vmatpush.msra.mxu0 0.0
      %646 = vmatpush.msra.mxu0 0.0
      %647 = vmatpush.msra.mxu0 0.0
      %648 = vmatpush.msra.mxu0 0.0
      %649 = vmatpush.msra.mxu0 0.0
      %650 = vmatpush.msra.mxu0 0.0
      %651 = vmatpush.msra.mxu0 0.0
      %652 = vmatpush.msra.mxu0 %v634
      %653 = vmatpush.msra.mxu0 %v633
      %654 = vmatmul.f32.gmra.mxu0 %v636
      %v655 = vpop.f32.mrf.mxu0
      %v656 = vadd.f32 %v628, %v655
      %657 = vdwg.mxu0
      %s658 = scalar_lea.vmem %s4, 16
      %v659 = vld [vmem:[%s658] sm:$0xff]
      %v660 = vld [vmem:[%s658 + $0x8] sm:$0xff]
      %v662 = vsel %vm426, %v631, 0
      %664 = vmatpush.msra.mxu0 0.0
      %665 = vmatpush.msra.mxu0 0.0
      %666 = vmatpush.msra.mxu0 0.0
      %667 = vmatpush.msra.mxu0 0.0
      %668 = vmatpush.msra.mxu0 0.0
      %669 = vmatpush.msra.mxu0 0.0
      %670 = vmatpush.msra.mxu0 0.0
      %671 = vmatpush.msra.mxu0 0.0
      %672 = vmatpush.msra.mxu0 0.0
      %673 = vmatpush.msra.mxu0 0.0
      %674 = vmatpush.msra.mxu0 0.0
      %675 = vmatpush.msra.mxu0 0.0
      %676 = vmatpush.msra.mxu0 0.0
      %677 = vmatpush.msra.mxu0 0.0
      %678 = vmatpush.msra.mxu0 %v660
      %679 = vmatpush.msra.mxu0 %v659
      %680 = vmatmul.f32.gmra.mxu0 %v662
      %v681 = vpop.f32.mrf.mxu0
      %v682 = vadd.f32 0.0, %v681
      %683 = vdwg.mxu0
      %v684 = vadd.f32 %v656, %v682
      %685 = vset.pattern.permute.xlu0 2
      %686 = vperm.xlu0 %685, %v380
      %v687 = vpop.permute.xlu0 %686
      %v689 = vadd.f32 %v684, %v687
      %v690 = vmax.f32 %v689, 0.0
      %s691 = scalar_lea.vmem %s6, 72
      %v692 = vld [vmem:[%s691] sm:$0xff]
      %v693 = vld [vmem:[%s691 + $0x8] sm:$0xff]
      %v694 = vld [vmem:[%s691 + $0x10] sm:$0xff]
      %v696 = vsel %vm388, %v692, 0
      %v699 = vsel %vm388, %v693, 0
      %v702 = vsel %vm388, %v694, 0
      %704 = vmatpush.msra.mxu0 0.0
      %705 = vmatpush.msra.mxu0 0.0
      %706 = vmatpush.msra.mxu0 0.0
      %707 = vmatpush.msra.mxu0 0.0
      %708 = vmatpush.msra.mxu0 0.0
      %709 = vmatpush.msra.mxu0 0.0
      %710 = vmatpush.msra.mxu0 0.0
      %711 = vmatpush.msra.mxu0 0.0
      %712 = vmatpush.msra.mxu0 0.0
      %713 = vmatpush.msra.mxu0 0.0
      %714 = vmatpush.msra.mxu0 0.0
      %715 = vmatpush.msra.mxu0 0.0
      %716 = vmatpush.msra.mxu0 0.0
      %717 = vmatpush.msra.mxu0 0.0
      %718 = vmatpush.msra.mxu0 0.0
      %719 = vmatpush.msra.mxu0 %v690
      %720 = vmatmul.f32.gmra.mxu0 %v696
      %v721 = vpop.f32.mrf.mxu0
      %v722 = vadd.f32 0.0, %v721
      %723 = vmatmul.f32.gmra.mxu0 %v699
      %v724 = vpop.f32.mrf.mxu0
      %v725 = vadd.f32 0.0, %v724
      %726 = vmatmul.f32.gmra.mxu0 %v702
      %v727 = vpop.f32.mrf.mxu0
      %v728 = vadd.f32 0.0, %v727
      %729 = vdwg.mxu0
      %v731 = vsel %vm426, %v722, 0
      %733 = vmatpush.msra.mxu0 0.0
      %734 = vmatpush.msra.mxu0 0.0
      %735 = vmatpush.msra.mxu0 0.0
      %736 = vmatpush.msra.mxu0 0.0
      %737 = vmatpush.msra.mxu0 0.0
      %738 = vmatpush.msra.mxu0 0.0
      %739 = vmatpush.msra.mxu0 0.0
      %740 = vmatpush.msra.mxu0 0.0
      %741 = vmatpush.msra.mxu0 0.0
      %742 = vmatpush.msra.mxu0 0.0
      %743 = vmatpush.msra.mxu0 0.0
      %744 = vmatpush.msra.mxu0 0.0
      %745 = vmatpush.msra.mxu0 0.0
      %746 = vmatpush.msra.mxu0 0.0
      %747 = vmatpush.msra.mxu0 %v634
      %748 = vmatpush.msra.mxu0 %v633
      %749 = vmatmul.f32.gmra.mxu0 %v731
      %v750 = vpop.f32.mrf.mxu0
      %v751 = vadd.f32 %v725, %v750
      %752 = vdwg.mxu0
      %v754 = vsel %vm426, %v728, 0
      %756 = vmatpush.msra.mxu0 0.0
      %757 = vmatpush.msra.mxu0 0.0
      %758 = vmatpush.msra.mxu0 0.0
      %759 = vmatpush.msra.mxu0 0.0
      %760 = vmatpush.msra.mxu0 0.0
      %761 = vmatpush.msra.mxu0 0.0
      %762 = vmatpush.msra.mxu0 0.0
      %763 = vmatpush.msra.mxu0 0.0
      %764 = vmatpush.msra.mxu0 0.0
      %765 = vmatpush.msra.mxu0 0.0
      %766 = vmatpush.msra.mxu0 0.0
      %767 = vmatpush.msra.mxu0 0.0
      %768 = vmatpush.msra.mxu0 0.0
      %769 = vmatpush.msra.mxu0 0.0
      %770 = vmatpush.msra.mxu0 %v660
      %771 = vmatpush.msra.mxu0 %v659
      %772 = vmatmul.f32.gmra.mxu0 %v754
      %v773 = vpop.f32.mrf.mxu0
      %v774 = vadd.f32 0.0, %v773
      %775 = vdwg.mxu0
      %v776 = vadd.f32 %v751, %v774
      %777 = vset.pattern.permute.xlu0 3
      %778 = vperm.xlu0 %777, %v380
      %v779 = vpop.permute.xlu0 %778
      %v781 = vadd.f32 %v776, %v779
      %v782 = vxor.u32 %v781, 2147483648
      %v783 = vmul.f32 %v782, 1.442695
      %v784 = vpow.pop %v783
      %v785 = vadd.f32 %v784, 1.0
      %v786 = vrcp.pop %v785
      %v787 = vmul.f32 %v785, %v786
      %v788 = vsub.f32 1.0, %v787
      %v789 = vmul.f32 %v786, %v788
      %v790 = vadd.f32 %v786, %v789
      %vm791 = vweird.f32 %v785
      %vm792 = vweird.f32 %v786
      %vm793 = vmor %vm791, %vm792
      %v794 = vsel %vm793, %v786, %v790
      %v795 = vand.u32 2147483647, %v785
      %vm796 = vcmp.eq.f32.partialorder %v795, 8.507059e+37
      %v797 = vand.u32 %v785, 2147483648
      %v798 = vor.u32 1.1754944e-38, %v797
      %v799 = vsel %vm796, %v798, %v794
      %v800 = vmul.f32 1.0, %v799
      %v801 = vld [vmem:[%s2] sm:$0xff]
      %v802 = vld [vmem:[%s2 + $0x8] sm:$0xff]
      %v803 = vld [vmem:[%s2 + $0x10] sm:$0xff]
      %v804 = vld [vmem:[%s2 + $0x18] sm:$0xff]
      %v806 = vsel %vm426, %v800, 0
      %808 = vmatpush.msra.mxu0 0.0
      %809 = vmatpush.msra.mxu0 0.0
      %810 = vmatpush.msra.mxu0 0.0
      %811 = vmatpush.msra.mxu0 0.0
      %812 = vmatpush.msra.mxu0 0.0
      %813 = vmatpush.msra.mxu0 0.0
      %814 = vmatpush.msra.mxu0 0.0
      %815 = vmatpush.msra.mxu0 0.0
      %816 = vmatpush.msra.mxu0 0.0
      %817 = vmatpush.msra.mxu0 0.0
      %818 = vmatpush.msra.mxu0 0.0
      %819 = vmatpush.msra.mxu0 0.0
      %820 = vmatpush.msra.mxu0 0.0
      %821 = vmatpush.msra.mxu0 0.0
      %822 = vmatpush.msra.mxu0 %v803
      %823 = vmatpush.msra.mxu0 %v801
      %824 = vmatmul.f32.gmra.mxu0 %v806
      %v825 = vpop.f32.mrf.mxu0
      %v826 = vadd.f32 0.0, %v825
      %827 = vdwg.mxu0
      %828 = vmatpush.msra.mxu0 0.0
      %829 = vmatpush.msra.mxu0 0.0
      %830 = vmatpush.msra.mxu0 0.0
      %831 = vmatpush.msra.mxu0 0.0
      %832 = vmatpush.msra.mxu0 0.0
      %833 = vmatpush.msra.mxu0 0.0
      %834 = vmatpush.msra.mxu0 0.0
      %835 = vmatpush.msra.mxu0 0.0
      %836 = vmatpush.msra.mxu0 0.0
      %837 = vmatpush.msra.mxu0 0.0
      %838 = vmatpush.msra.mxu0 0.0
      %839 = vmatpush.msra.mxu0 0.0
      %840 = vmatpush.msra.mxu0 0.0
      %841 = vmatpush.msra.mxu0 0.0
      %842 = vmatpush.msra.mxu0 %v804
      %843 = vmatpush.msra.mxu0 %v802
      %844 = vmatmul.f32.gmra.mxu0 %v806
      %v845 = vpop.f32.mrf.mxu0
      %v846 = vadd.f32 0.0, %v845
      %847 = vdwg.mxu0
      %v848 = vld [vmem:[%s3] sm:$0xff]
      %v849 = vld [vmem:[%s3 + $0x8] sm:$0xff]
      %v850 = vld [vmem:[%s3 + $0x10] sm:$0xff]
      %v851 = vld [vmem:[%s3 + $0x18] sm:$0xff]
      %v853 = vsel %vm426, %v593, 0
      %855 = vmatpush.msra.mxu0 0.0
      %856 = vmatpush.msra.mxu0 0.0
      %857 = vmatpush.msra.mxu0 0.0
      %858 = vmatpush.msra.mxu0 0.0
      %859 = vmatpush.msra.mxu0 0.0
      %860 = vmatpush.msra.mxu0 0.0
      %861 = vmatpush.msra.mxu0 0.0
      %862 = vmatpush.msra.mxu0 0.0
      %863 = vmatpush.msra.mxu0 0.0
      %864 = vmatpush.msra.mxu0 0.0
      %865 = vmatpush.msra.mxu0 0.0
      %866 = vmatpush.msra.mxu0 0.0
      %867 = vmatpush.msra.mxu0 0.0
      %868 = vmatpush.msra.mxu0 0.0
      %869 = vmatpush.msra.mxu0 %v850
      %870 = vmatpush.msra.mxu0 %v848
      %871 = vmatmul.f32.gmra.mxu0 %v853
      %v872 = vpop.f32.mrf.mxu0
      %v873 = vadd.f32 0.0, %v872
      %874 = vdwg.mxu0
      %875 = vmatpush.msra.mxu0 0.0
      %876 = vmatpush.msra.mxu0 0.0
      %877 = vmatpush.msra.mxu0 0.0
      %878 = vmatpush.msra.mxu0 0.0
      %879 = vmatpush.msra.mxu0 0.0
      %880 = vmatpush.msra.mxu0 0.0
      %881 = vmatpush.msra.mxu0 0.0
      %882 = vmatpush.msra.mxu0 0.0
      %883 = vmatpush.msra.mxu0 0.0
      %884 = vmatpush.msra.mxu0 0.0
      %885 = vmatpush.msra.mxu0 0.0
      %886 = vmatpush.msra.mxu0 0.0
      %887 = vmatpush.msra.mxu0 0.0
      %888 = vmatpush.msra.mxu0 0.0
      %889 = vmatpush.msra.mxu0 %v851
      %890 = vmatpush.msra.mxu0 %v849
      %891 = vmatmul.f32.gmra.mxu0 %v853
      %v892 = vpop.f32.mrf.mxu0
      %v893 = vadd.f32 0.0, %v892
      %894 = vdwg.mxu0
      %v895 = vmul.f32 %v826, %v873
      %v896 = vmul.f32 %v846, %v893
      %897 = vset.pattern.permute.xlu0 4
      %898 = vperm.xlu0 %897, %v380
      %v899 = vpop.permute.xlu0 %898
      %v901 = vmul.f32 %v306, %v899
      %v902 = vmul.f32 %v307, %v899
      %903 = vset.pattern.permute.xlu0 5
      %904 = vperm.xlu0 %903, %v380
      %v905 = vpop.permute.xlu0 %904
      %v907 = vadd.f32 %v901, %v905
      %v908 = vadd.f32 %v902, %v905
      %v909 = vmul.f32 %v895, %v907
      %v910 = vmul.f32 %v896, %v908
      %911 = vst [vmem:[%s305] sm:$0xff] %v909
      %912 = vst [vmem:[%s305 + $0x8] sm:$0xff] %v910
      %p913 = scmp.lt.s32.totalorder %s19, 1
      %s914 = scalar_select %p913, %s19, 1
      %s915 = smul.addr %s914, 2
      %s916 = smul.addr %s915, 8
      %s917 = scalar_lea.vmem %s8, %s916
      // Predicated region
      $region53: #{tfatten_forward.1} parent=51 // pred_check
        %p918 = pneg %p210
      $region54: #{tfatten_forward.1} parent=51 // pred_check_branch
        %920 = sbr.rel (%p918) target = $region56
      $region55: #{tfatten_forward.1} parent=51 // pred_region
        _
      $region56: #{tfatten_forward.1} parent=51 // pred_fallthru
        _
    $region52: #{tfatten_forward.1} parent=5 // pred_fallthru
      _
    %p921 = scmp.le.s32.totalorder 2, %s14
    // Predicated region
    $region57: #{tfatten_forward.1} parent=5 // pred_check
      %p922 = pneg %p921
    $region58: #{tfatten_forward.1} parent=5 // pred_check_branch
      %924 = sbr.rel (%p922) target = $region60
    $region59: #{tfatten_forward.1} parent=5 // pred_region
      %s925 = ssub.s32 %s14, 2
      // Predicated region
      $region61: #{tfatten_forward.1} parent=59 // pred_check
        %p926 = pneg %p216
      $region62: #{tfatten_forward.1} parent=59 // pred_check_branch
        %928 = sbr.rel (%p926) target = $region64
      $region63: #{tfatten_forward.1} parent=59 // pred_region
        %p929 = scmp.lt.s32.totalorder %s20, 1
        %s930 = scalar_select %p929, %s20, 1
        %s931 = smul.addr %s930, 2
        %s932 = smul.addr %s931, 8
        %s933 = scalar_lea.vmem %s8, %s932
      $region64: #{tfatten_forward.1} parent=59 // pred_fallthru
        _
    $region60: #{tfatten_forward.1} parent=5 // pred_fallthru
      _
  $region6: #{tfatten_forward.1} parent=0 // loop_footer
    %s18 = sadd.s32 1, %s14
  $region7: #{tfatten_forward.1} parent=0 // loop_footer_branch
    %13 = sbr.rel target = $region3
  $region8: #{tfatten_forward.1} parent=0 // loop_exit
    _

</llo_original>
